<compile_context>
chip_gen: v7x
topology: tpu7x:2x2x1
jax: 0.10.0
libtpu: 0.0.40
codegen_flags: <defaults>
</compile_context>

<pallas_src>
import functools

import jax
import jax.numpy as jnp
from jax.experimental import pallas as pl
from jax.experimental.pallas import tpu as pltpu


_EPS = float(jnp.finfo(jnp.float32).eps)    # torch.finfo() defaults to float32
_FMAX = float(jnp.finfo(jnp.float32).max)


# ---------------------------------------------------------------------------
# Generation-aware sizing
# ---------------------------------------------------------------------------

def _vmem_capacity_bytes() -> int:
    try:
        return int(pltpu.get_tpu_info().vmem_capacity_bytes)
    except Exception:
        return 64 * 1024 * 1024             # conservative (v7x-sized) fallback


def _budgets():
    """Returns (pass-2 block budget, scoped-VMEM limit) for this generation."""
    cap = _vmem_capacity_bytes()
    if cap >= 96 * 1024 * 1024:             # v5e / v6e: 128 MiB VMEM per core
        return 8 * 1024 * 1024, 64 * 1024 * 1024
    return 4 * 1024 * 1024, 40 * 1024 * 1024    # v7x: 64 MiB VMEM per TensorCore


def _largest_divisor_leq(n: int, k: int) -> int:
    k = max(1, min(n, k))
    for d in range(k, 0, -1):
        if n % d == 0:
            return d
    return 1


def _pick_block(n: int, c: int, hw: int, itemsize: int, budget_bytes: int):
    """Pick (nb, tile): nb divides n, tile is a multiple of 128 or == hw."""
    budget_elems = max(1, budget_bytes // max(1, c * itemsize))
    if hw > budget_elems:
        tile = max(128, (budget_elems // 128) * 128)
        return 1, min(tile, hw)
    nb = _largest_divisor_leq(n, budget_elems // hw)
    return nb, hw


# ---------------------------------------------------------------------------
# Kernels
# ---------------------------------------------------------------------------

def _fused_kernel(x_ref, o_ref, *, count, eps, fmax):
    """Single-pass path: tensor resident in VMEM, exact two-pass statistics."""
    x = x_ref[...].astype(jnp.float32)                          # (N, C, HW)
    s = jnp.sum(jnp.sum(x, axis=2, keepdims=True), axis=0, keepdims=True)
    mean = s * jnp.float32(1.0 / count)
    xc = x - mean
    denom = jnp.float32(count - 1 if count > 1 else 1)          # torch would NaN at count==1
    ssq = jnp.sum(jnp.sum(xc * xc, axis=2, keepdims=True), axis=0, keepdims=True)
    std = jnp.clip(jnp.sqrt(ssq / denom), jnp.float32(eps), jnp.float32(fmax))
    o_ref[...] = (xc * (1.0 / std)).astype(o_ref.dtype)


def _stats_kernel(shift_ref, x_ref, psum_ref, psumsq_ref, *, hw, tile, ragged):
    """Pass 1: per-(N-block) channel sum / sum-of-squares of (x - shift)."""
    t = pl.program_id(1)

    @pl.when(t == 0)
    def _init():
        psum_ref[...] = jnp.zeros_like(psum_ref)
        psumsq_ref[...] = jnp.zeros_like(psumsq_ref)

    d = x_ref[...].astype(jnp.float32) - shift_ref[...]         # (nb, C, tile)

    def _accum(dv):
        psum_ref[...] += jnp.sum(jnp.sum(dv, axis=2, keepdims=True),
                                 axis=0, keepdims=True)
        psumsq_ref[...] += jnp.sum(jnp.sum(dv * dv, axis=2, keepdims=True),
                                   axis=0, keepdims=True)

    if ragged:
        last = pl.num_programs(1) - 1

        @pl.when(t != last)
        def _full_tile():
            _accum(d)

        @pl.when(t == last)                 # mask only the final ragged lane tile
        def _ragged_tile():
            lane = jax.lax.broadcasted_iota(jnp.int32, d.shape, dimension=2)
            _accum(jnp.where(t * tile + lane < hw, d, 0.0))
    else:
        _accum(d)


def _normalize_kernel(mean_ref, inv_std_ref, x_ref, o_ref):
    """Pass 2: stream tiles, apply (x - mean) * inv_std."""
    x = x_ref[...].astype(jnp.float32)                          # (nb, C, tile)
    o_ref[...] = ((x - mean_ref[...]) * inv_std_ref[...]).astype(o_ref.dtype)


# ---------------------------------------------------------------------------
# Wrapper
# ---------------------------------------------------------------------------

def normalize_batch(x: jax.Array, *, allow_fused: bool = True,
                    block_budget_bytes=None) -> jax.Array:
    """Pallas TPU implementation of NormalizeBatch(axis=[0, 2, 3]) for NCHW input."""
    n, c, h, w = x.shape
    hw = h * w
    count = n * hw
    x3 = x.reshape(n, c, hw)                 # free reshape: no HBM transpose

    base_budget, vmem_limit = _budgets()
    if block_budget_bytes is not None:
        base_budget = int(block_budget_bytes)

    # ---- fused fast path: whole tensor (+ f32 temporaries) resident in VMEM ----
    f32_bytes = n * c * hw * 4
    if allow_fused and 6 * f32_bytes <= vmem_limit:
        out3 = pl.pallas_call(
            functools.partial(_fused_kernel, count=count, eps=_EPS, fmax=_FMAX),
            out_shape=jax.ShapeDtypeStruct((n, c, hw), x.dtype),
            grid=(1,),
            in_specs=[pl.BlockSpec((n, c, hw), lambda i: (0, 0, 0))],
            out_specs=pl.BlockSpec((n, c, hw), lambda i: (0, 0, 0)),
            compiler_params=pltpu.CompilerParams(
                dimension_semantics=("arbitrary",),
                vmem_limit_bytes=vmem_limit),
        )(x3)
        return out3.reshape(n, c, h, w)

    itemsize = x.dtype.itemsize

    # Coarse per-channel shift (mean of a small leading slice): removes the
    # catastrophic-cancellation risk of fused sum/sumsq variance.  Tiny XLA read.
    shift = jnp.mean(x3[:1, :, :min(hw, 128)].astype(jnp.float32),
                     axis=(0, 2), keepdims=True)                # (1, C, 1) f32

    # ---- pass 1: per-channel (shifted) sum / sumsq -----------------------------
    # Only the input is double-buffered here, so pass 1 takes 2x the block budget.
    nb1, tile1 = _pick_block(n, c, hw, itemsize, 2 * base_budget)
    gn1, gt1 = n // nb1, pl.cdiv(hw, tile1)
    data1 = pl.BlockSpec((nb1, c, tile1), lambda i, t: (i, 0, t))
    stat1 = pl.BlockSpec((1, c, 1), lambda i, t: (i, 0, 0))
    bcast1 = pl.BlockSpec((1, c, 1), lambda i, t: (0, 0, 0))

    psum, psumsq = pl.pallas_call(
        functools.partial(_stats_kernel, hw=hw, tile=tile1,
                          ragged=(hw % tile1 != 0)),
        out_shape=(jax.ShapeDtypeStruct((gn1, c, 1), jnp.float32),
                   jax.ShapeDtypeStruct((gn1, c, 1), jnp.float32)),
        grid=(gn1, gt1),
        in_specs=[bcast1, data1],
        out_specs=(stat1, stat1),
        compiler_params=pltpu.CompilerParams(
            # axis 0 "parallel": per-N-block partials let both v7x cores work;
            # axis 1 is the lane-tile reduction -> VMEM-resident accumulator.
            dimension_semantics=("parallel", "arbitrary"),
            vmem_limit_bytes=vmem_limit),
    )(shift, x3)

    # ---- finalize statistics once (tiny XLA ops, hoisted out of pass 2) --------
    s = jnp.sum(psum, axis=0, keepdims=True)                    # (1, C, 1) f32
    q = jnp.sum(psumsq, axis=0, keepdims=True)
    mean = shift + s / count
    denom = count - 1 if count > 1 else 1                       # torch would NaN at count==1
    var = jnp.maximum((q - s * s / count) / denom, 0.0)
    inv_std = 1.0 / jnp.clip(jnp.sqrt(var), _EPS, _FMAX)

    # ---- pass 2: streaming normalize --------------------------------------------
    nb2, tile2 = _pick_block(n, c, hw, itemsize, base_budget)
    gn2, gt2 = n // nb2, pl.cdiv(hw, tile2)
    data2 = pl.BlockSpec((nb2, c, tile2), lambda i, t: (i, 0, t))
    bcast2 = pl.BlockSpec((1, c, 1), lambda i, t: (0, 0, 0))

    out3 = pl.pallas_call(
        _normalize_kernel,
        out_shape=jax.ShapeDtypeStruct((n, c, hw), x.dtype),
        grid=(gn2, gt2),
        in_specs=[bcast2, bcast2, data2],
        out_specs=data2,
        compiler_params=pltpu.CompilerParams(
            dimension_semantics=("parallel", "parallel"),
            vmem_limit_bytes=vmem_limit),
    )(mean, inv_std, x3)

    return out3.reshape(n, c, h, w)


# ---------------------------------------------------------------------------
# Reference + test
# ---------------------------------------------------------------------------

def _reference(x: jax.Array) -> jax.Array:
    mean = jnp.mean(x, axis=(0, 2, 3), keepdims=True)
    m = x.shape[0] * x.shape[2] * x.shape[3]
    var = jnp.sum((x - mean) ** 2, axis=(0, 2, 3), keepdims=True) / max(m - 1, 1)
    std = jnp.clip(jnp.sqrt(var), _EPS, _FMAX)
    return (x - mean) / std


if __name__ == "__main__":
    key = jax.random.PRNGKey(0)
    k1, k2, k3 = jax.random.split(key, 3)

    def _check(x, **kw):
        out = jax.block_until_ready(normalize_batch(x, **kw))
        ref = _reference(x)
        assert out.shape == x.shape and out.dtype == x.dtype
        err = float(jnp.max(jnp.abs(out - ref)))
        assert jnp.allclose(out, ref, atol=1e-5, rtol=1e-5), err

    # 1) Small NCHW batch -> fused single-pass VMEM-resident path.
    xa = jax.random.normal(k1, (2, 4, 16, 16), dtype=jnp.float32) * 3.0 + 1.5
    _check(xa)

    # 2) Streaming two-pass path with a ragged last lane tile (forced tiny budget).
    xb = jax.random.normal(k2, (2, 4, 16, 18), dtype=jnp.float32) * 2.0 - 0.7
    _check(xb, allow_fused=False, block_budget_bytes=2048)

    # 3) Streaming path blocked over N (small H*W, nb > 1) with un-centered data
    #    (exercises the shifted sum/sumsq numerics).
    xc = jax.random.normal(k3, (4, 4, 8, 8), dtype=jnp.float32) * 0.5 + 4.0
    _check(xc, allow_fused=False, block_budget_bytes=2048)

    print("KERNEL_OK")
</pallas_src>

<mosaic_0001>
module attributes {stable_mosaic.version = 11 : i64} {
  func.func @_fused_kernel(%arg0: i32, %arg1: memref<2x4x256xf32, #tpu.memory_space<vmem>>, %arg2: memref<2x4x256xf32, #tpu.memory_space<vmem>>) attributes {dimension_semantics = [#tpu.dimension_semantics<arbitrary>], iteration_bounds = array<i64: 1>, scalar_prefetch = 0 : i64, scratch_operands = 0 : i64, tpu.core_type = #tpu.core_type<tc>, window_params = [{pipeline_mode = #tpu.pipeline_mode<synchronous>, transform_indices = @transform_0, window_bounds = array<i64: 2, 4, 256>}, {pipeline_mode = #tpu.pipeline_mode<synchronous>, transform_indices = @transform_1, window_bounds = array<i64: 2, 4, 256>}]} {
    %c0 = arith.constant 0 : index
    %c0_0 = arith.constant 0 : index
    %c0_1 = arith.constant 0 : index
    %0 = vector.load %arg1[%c0, %c0_0, %c0_1] : memref<2x4x256xf32, #tpu.memory_space<vmem>>, vector<2x4x256xf32>
    %cst = arith.constant dense<0.000000e+00> : vector<2x4xf32>
    %1 = vector.multi_reduction <add>, %0, %cst [2] : vector<2x4x256xf32> to vector<2x4xf32>
    %2 = vector.shape_cast %1 : vector<2x4xf32> to vector<2x4x1xf32>
    %cst_2 = arith.constant dense<0.000000e+00> : vector<4x1xf32>
    %3 = vector.multi_reduction <add>, %2, %cst_2 [0] : vector<2x4x1xf32> to vector<4x1xf32>
    %4 = vector.shape_cast %3 : vector<4x1xf32> to vector<1x4x1xf32>
    %cst_3 = arith.constant 0.001953125 : f32
    %5 = vector.broadcast %cst_3 : f32 to vector<1x4x1xf32>
    %6 = arith.mulf %4, %5 : vector<1x4x1xf32>
    %7 = vector.broadcast %6 : vector<1x4x1xf32> to vector<2x4x256xf32>
    %8 = arith.subf %0, %7 : vector<2x4x256xf32>
    %9 = arith.mulf %8, %8 : vector<2x4x256xf32>
    %cst_4 = arith.constant dense<0.000000e+00> : vector<2x4xf32>
    %10 = vector.multi_reduction <add>, %9, %cst_4 [2] : vector<2x4x256xf32> to vector<2x4xf32>
    %11 = vector.shape_cast %10 : vector<2x4xf32> to vector<2x4x1xf32>
    %cst_5 = arith.constant dense<0.000000e+00> : vector<4x1xf32>
    %12 = vector.multi_reduction <add>, %11, %cst_5 [0] : vector<2x4x1xf32> to vector<4x1xf32>
    %13 = vector.shape_cast %12 : vector<4x1xf32> to vector<1x4x1xf32>
    %cst_6 = arith.constant 5.110000e+02 : f32
    %14 = vector.broadcast %cst_6 : f32 to vector<1x4x1xf32>
    %15 = arith.divf %13, %14 : vector<1x4x1xf32>
    %16 = math.sqrt %15 : vector<1x4x1xf32>
    %cst_7 = arith.constant 1.1920929E-7 : f32
    %cst_8 = arith.constant 3.40282347E+38 : f32
    %17 = vector.broadcast %cst_7 : f32 to vector<1x4x1xf32>
    %18 = arith.maximumf %17, %16 : vector<1x4x1xf32>
    %19 = vector.broadcast %cst_8 : f32 to vector<1x4x1xf32>
    %20 = arith.minimumf %19, %18 : vector<1x4x1xf32>
    %cst_9 = arith.constant 1.000000e+00 : f32
    %21 = vector.broadcast %cst_9 : f32 to vector<1x4x1xf32>
    %22 = arith.divf %21, %20 : vector<1x4x1xf32>
    %23 = vector.broadcast %22 : vector<1x4x1xf32> to vector<2x4x256xf32>
    %24 = arith.mulf %8, %23 : vector<2x4x256xf32>
    %c0_10 = arith.constant 0 : index
    %c0_11 = arith.constant 0 : index
    %c0_12 = arith.constant 0 : index
    %25 = vector.load %arg2[%c0_10, %c0_11, %c0_12] : memref<2x4x256xf32, #tpu.memory_space<vmem>>, vector<2x4x256xf32>
    tpu.vector_store %arg2[%c0_10, %c0_11, %c0_12], %24 {strides = array<i32>} : memref<2x4x256xf32, #tpu.memory_space<vmem>>, vector<2x4x256xf32>,
    return
  }
  func.func @transform_0(%arg0: i32) -> (i32, i32, i32) {
    %c0_i32 = arith.constant 0 : i32
    %c0_i32_0 = arith.constant 0 : i32
    %c0_i32_1 = arith.constant 0 : i32
    %c0_i32_2 = arith.constant 0 : i32
    return %c0_i32, %c0_i32_0, %c0_i32_1 : i32, i32, i32
  }
  func.func @transform_1(%arg0: i32) -> (i32, i32, i32) {
    %c0_i32 = arith.constant 0 : i32
    %c0_i32_0 = arith.constant 0 : i32
    %c0_i32_1 = arith.constant 0 : i32
    %c0_i32_2 = arith.constant 0 : i32
    return %c0_i32, %c0_i32_0, %c0_i32_1 : i32, i32, i32
  }
}

</mosaic_0001>

<llo_original>
// kernel: tpu_custom_call.1
$region0: #{tpu_custom_call.1}
  #allocation0 [shape = 'u32[]', space=smem, size = 0x4, offset = 0x4, fixed_abs, tag = 'smem constant byte address 0x4 - core index']
  #allocation1 [shape = 'u32[144,128]{1,0:T(1,128)}', space=vmem, size = 0x12000, scoped, tag = 'internal scratch']
  %s0 = inlined_call_operand.hbm [shape: f32[2,4,256], index: 0, kind: input, shape index: {}]
  %s1 = inlined_call_operand.hbm [shape: f32[2,4,256], index: 1, kind: output, shape index: {}]
  %s2 = sld [smem:[#allocation0]]
  $region18: #{tpu_custom_call.1} parent=0
    _
  %s4 = ssub.s32 1, %s2
  %s5 = scalar_select 0, %s4, %s2
  $region1: #{tpu_custom_call.1} parent=0
    #allocation2 [shape = 'u8[8192]{0}', space=vmem, size = 0x2000, scoped, tag = 'input window, operand 0, single buffered']
    #allocation3 [shape = 's32[1]{0}', space=sflag, size = 0x4, scoped, tag = 'scoped memory for tpu_custom_call.1']
    #allocation4 [shape = 's32[1]{0}', space=sflag, size = 0x4, scoped, tag = 'scoped memory for tpu_custom_call.1']
    #allocation5 [shape = 'u8[8192]{0}', space=vmem, size = 0x2000, scoped, tag = 'output window, operand 0, single buffered']
    %6 = vsyncpa [#allocation3], 0
    %7 = vsyncpa [#allocation4], 0
    // Predicated region
    $region2: #{tpu_custom_call.1} parent=1 // pred_check
      _
    $region3: #{tpu_custom_call.1} parent=1 // pred_check_branch
      %9 = sbr.rel (0) target = $region5
    $region4: #{tpu_custom_call.1} parent=1 // pred_region
      %s11 = ssub.s32 256, 256
      %12 = vsyncadd [#allocation3], %s11
      %s13 = sshll.u32 [#allocation2], 4
      %s14 = int_to_ptr.vmem [resolvable:$true] %s13
      %19 = dma.hbm_to_vmem [thread:$0]  %s0, 256, %s14, [#allocation3], 128, 128, 8
    $region5: #{tpu_custom_call.1} parent=1 // pred_fallthru
      _
    // Predicated region
    $region6: #{tpu_custom_call.1} parent=1 // pred_check
      _
    $region7: #{tpu_custom_call.1} parent=1 // pred_check_branch
      %21 = sbr.rel (0) target = $region9
    $region8: #{tpu_custom_call.1} parent=1 // pred_region
      %22 = dma.done [#allocation3], 256
    $region9: #{tpu_custom_call.1} parent=1 // pred_fallthru
      _
    %v23 = vld [vmem:[#allocation2] sm:$0xff]
    %v24 = vld [vmem:[#allocation2 + $0x8] sm:$0xff]
    %v27 = vcombine.high %v23, %v23
    %v28 = vcombine.high %v24, %v24
    %vm31 = vcmask 1043456
    %v32 = vsel %vm31, %v23, 0.0
    %v33 = vsel %vm31, %v27, 0.0
    %v34 = vadd.f32 %v32, %v33
    %35 = vadd.xlane.f32.xlu0 %v34
    %v36 = vpop.xlane.xlu0 %35
    %v37 = vsel %vm31, %v24, 0.0
    %v38 = vsel %vm31, %v28, 0.0
    %v39 = vadd.f32 %v37, %v38
    %40 = vadd.xlane.f32.xlu0 %v39
    %v41 = vpop.xlane.xlu0 %40
    %v42 = vsel %vm31, %v36, 0.0
    %v43 = vsel %vm31, %v41, 0.0
    %v44 = vadd.f32 %v42, %v43
    %v45 = vmul.f32 %v44, 0.001953125
    %v48 = vunpack.c.l.s4 839922192
    %v49 = vunpack.c.0.s8 %v48
    %v50 = vlaneseq
    %v51 = vshrl.u32 %v50, 7
    %v52 = vsub.s32 %v49, %v51
    %v53 = vrot.slane %v45, %v52
    %v55 = vsub.f32 %v23, %v53
    %v56 = vsub.f32 %v24, %v53
    %v57 = vmul.f32 %v55, %v55
    %v58 = vmul.f32 %v56, %v56
    %v61 = vcombine.high %v57, %v57
    %v62 = vcombine.high %v58, %v58
    %v65 = vsel %vm31, %v57, 0.0
    %v66 = vsel %vm31, %v61, 0.0
    %v67 = vadd.f32 %v65, %v66
    %68 = vadd.xlane.f32.xlu0 %v67
    %v69 = vpop.xlane.xlu0 %68
    %v70 = vsel %vm31, %v58, 0.0
    %v71 = vsel %vm31, %v62, 0.0
    %v72 = vadd.f32 %v70, %v71
    %73 = vadd.xlane.f32.xlu0 %v72
    %v74 = vpop.xlane.xlu0 %73
    %v75 = vsel %vm31, %v69, 0.0
    %v76 = vsel %vm31, %v74, 0.0
    %v77 = vadd.f32 %v75, %v76
    %v78 = vrcp.pop 511.0
    %v79 = vmul.f32 %v77, %v78
    %v80 = vrsqrt.pop %v79
    %v81 = vmul.f32 %v79, %v80
    %vm82 = vcmp.eq.f32.partialorder %v79, inf
    %v83 = vsel %vm82, %v79, %v81
    %vm84 = vcmp.eq.f32.partialorder %v79, 0.0
    %v85 = vand.u32 %v79, 2147483648
    %v86 = vsel %vm84, %v85, %v83
    %v87 = vmax.f32 %v86, 1.1920929e-07
    %v88 = vmin.f32 %v87, 3.4028235e+38
    %v89 = vrcp.pop %v88
    %v90 = vmul.f32 1.0, %v89
    %v93 = vunpack.c.l.s4 839922192
    %v94 = vunpack.c.0.s8 %v93
    %v95 = vlaneseq
    %v96 = vshrl.u32 %v95, 7
    %v97 = vsub.s32 %v94, %v96
    %v98 = vrot.slane %v90, %v97
    %v100 = vmul.f32 %v55, %v98
    %v101 = vmul.f32 %v56, %v98
    %102 = vst [vmem:[#allocation5] sm:$0xff] %v100
    %103 = vst [vmem:[#allocation5 + $0x8] sm:$0xff] %v101
    // Predicated region
    $region10: #{tpu_custom_call.1} parent=1 // pred_check
      _
    $region11: #{tpu_custom_call.1} parent=1 // pred_check_branch
      %105 = sbr.rel (0) target = $region13
    $region12: #{tpu_custom_call.1} parent=1 // pred_region
      %s107 = ssub.s32 256, 256
      %108 = vsyncadd [#allocation4], %s107
      %s109 = sshll.u32 [#allocation5], 4
      %s110 = int_to_ptr.vmem [resolvable:$true] %s109
      %115 = dma.vmem_to_hbm [thread:$0]  %s110, 256, %s1, [#allocation4], 128, 128, 8
    $region13: #{tpu_custom_call.1} parent=1 // pred_fallthru
      _
    // Predicated region
    $region14: #{tpu_custom_call.1} parent=1 // pred_check
      _
    $region15: #{tpu_custom_call.1} parent=1 // pred_check_branch
      %117 = sbr.rel (0) target = $region17
    $region16: #{tpu_custom_call.1} parent=1 // pred_region
      %118 = dma.done [#allocation4], 256
    $region17: #{tpu_custom_call.1} parent=1 // pred_fallthru
      _
    %119 = vsyncpa [#allocation3], 1
    %120 = vsyncpa [#allocation4], 1

</llo_original>
